<compile_context>
chip_gen: v7x
topology: tpu7x:2x2x1
jax: 0.10.0
libtpu: 0.0.40
codegen_flags: <defaults>
</compile_context>

<pallas_src>
import functools

import jax
import jax.numpy as jnp
from jax import lax
from jax.experimental import pallas as pl
from jax.experimental.pallas import tpu as pltpu

LN_EPS = 1e-5       # PyTorch nn.LayerNorm default eps
_LANE = 128
_SUBLANE = 8


def _round_up(x, m):
    return (x + m - 1) // m * m


def _critic_kernel(s_ref, a_ref,
                   w1_ref, b1_ref,
                   w2a_ref, w2b_ref, b2_ref,
                   w3_ref, b3_ref,
                   g0_ref, be0_ref,
                   g1_ref, be1_ref,
                   g2_ref, be2_ref,
                   out_ref,
                   *, n_in, n_h1, n_h2, mxu_dtype):
    """One batch tile of the full critic forward.

    states/actions arrive unpadded; the hidden dims are lane-padded (padded
    weight columns / gamma / beta are zero) and `n_*` are the true feature
    counts used for the LayerNorm statistics, so the math is identical to the
    unpadded PyTorch module."""

    def layernorm(x, gamma, beta, n_true):
        # Single-pass statistics: two independent lane reductions (better ILP
        # than mean -> centered mean).  Any padded lanes of x are exact zeros
        # so the sums are exact; divide by the true feature count; padded
        # gamma/beta are zero so padded output lanes stay zero.
        inv_n = 1.0 / float(n_true)
        sx = jnp.sum(x, axis=-1, keepdims=True)
        sxx = jnp.sum(x * x, axis=-1, keepdims=True)
        mu = sx * inv_n
        var = jnp.maximum(sxx * inv_n - mu * mu, 0.0)
        return (x - mu) * lax.rsqrt(var + LN_EPS) * gamma + beta

    # --- bn0(states) -> fc1 ---
    s = layernorm(s_ref[...], g0_ref[...], be0_ref[...], n_in)
    h1 = (jnp.dot(s.astype(mxu_dtype), w1_ref[...],
                  preferred_element_type=jnp.float32)
          + b1_ref[...])

    # --- relu(bn1(h1)) ---
    h1 = jnp.maximum(layernorm(h1, g1_ref[...], be1_ref[...], n_h1), 0.0)

    # --- fc2(concat([h1, actions], 1)) as an exact split matmul ---
    h2 = (jnp.dot(h1.astype(mxu_dtype), w2a_ref[...],
                  preferred_element_type=jnp.float32)
          + jnp.dot(a_ref[...].astype(mxu_dtype), w2b_ref[...],
                    preferred_element_type=jnp.float32)
          + b2_ref[...])

    # --- relu(bn2(h2)) ---
    h2 = jnp.maximum(layernorm(h2, g2_ref[...], be2_ref[...], n_h2), 0.0)

    # --- fc3 (single output column): VPU multiply + lane reduction, stored
    #     directly into the narrow (tb, 1) output block ---
    q = jnp.sum(h2 * w3_ref[...], axis=-1, keepdims=True)          # (tb, 1)
    out_ref[...] = q + b3_ref[...]


def prepare_params(params, mxu_dtype=jnp.bfloat16):
    """ONE-TIME weight preparation (call at init, not per forward).

    Pads the hidden (output-feature) dims to 128-lane multiples with zeros,
    casts matmul weights to `mxu_dtype` (bf16 by default: full-rate MXU on
    v5e/v6e/v7x; accumulation in the kernel stays f32).  Input feature dims
    (input_dims / n_actions) are left unpadded to match the raw batch inputs."""
    f32 = jnp.float32
    input_dims, fc1 = params["w1"].shape
    n_actions, fc2 = params["w2b"].shape
    f1_p = _round_up(fc1, _LANE)
    f2_p = _round_up(fc2, _LANE)

    def pad2(x, rows, cols, dtype=f32):
        x = jnp.asarray(x, f32)
        return jnp.pad(x, ((0, rows - x.shape[0]),
                           (0, cols - x.shape[1]))).astype(dtype)

    return {
        "w1": pad2(params["w1"], input_dims, f1_p, mxu_dtype),   # (in, f1_p)
        "b1": pad2(params["b1"], 1, f1_p),
        "w2a": pad2(params["w2a"], f1_p, f2_p, mxu_dtype),       # (f1_p, f2_p)
        "w2b": pad2(params["w2b"], n_actions, f2_p, mxu_dtype),  # (act, f2_p)
        "b2": pad2(params["b2"], 1, f2_p),
        "w3": pad2(jnp.asarray(params["w3"], f32).reshape(1, fc2), 1, f2_p),
        "b3": jnp.asarray(params["b3"], f32).reshape(1, 1),
        "g0": jnp.asarray(params["g0"], f32).reshape(1, input_dims),
        "be0": jnp.asarray(params["be0"], f32).reshape(1, input_dims),
        "g1": pad2(params["g1"], 1, f1_p),
        "be1": pad2(params["be1"], 1, f1_p),
        "g2": pad2(params["g2"], 1, f2_p),
        "be2": pad2(params["be2"], 1, f2_p),
        "dims": (input_dims, n_actions, fc1, fc2),
        "mxu_dtype": mxu_dtype,
    }


def critic_forward(states, actions, prep, *, block_batch=512):
    """Fused DDPG-critic forward on pre-prepared params (see prepare_params).

    block_batch: batch tile size; VMEM use is only a few MB even at 2048 with
    the default (400, 300) hidden dims, so sweep 512/1024/2048 -- larger tiles
    amortize the ~0.35us per-grid-step overhead (no need to shrink on v7x)."""
    batch, input_dims = states.shape
    n_actions = actions.shape[1]
    d_in, d_act, fc1, fc2 = prep["dims"]
    assert (input_dims, n_actions) == (d_in, d_act), "shape/params mismatch"

    tb = min(block_batch, _round_up(batch, _SUBLANE))
    tb = _round_up(tb, _SUBLANE)
    n_tiles = pl.cdiv(batch, tb)

    states = jnp.asarray(states, jnp.float32)
    actions = jnp.asarray(actions, jnp.float32)

    def batch_spec(cols):
        # Raw (unpadded) batch inputs: last dim == full array extent is legal.
        return pl.BlockSpec((tb, cols), lambda i: (i, 0))

    def resident(arr):
        # Constant block index -> fetched once, stays resident in VMEM.
        return pl.BlockSpec(arr.shape, lambda i: (0, 0))

    kernel = functools.partial(_critic_kernel, n_in=input_dims, n_h1=fc1,
                               n_h2=fc2, mxu_dtype=prep["mxu_dtype"])

    out = pl.pallas_call(
        kernel,
        out_shape=jax.ShapeDtypeStruct((batch, 1), jnp.float32),
        grid=(n_tiles,),
        in_specs=[
            batch_spec(input_dims), batch_spec(n_actions),
            resident(prep["w1"]), resident(prep["b1"]),
            resident(prep["w2a"]), resident(prep["w2b"]), resident(prep["b2"]),
            resident(prep["w3"]), resident(prep["b3"]),
            resident(prep["g0"]), resident(prep["be0"]),
            resident(prep["g1"]), resident(prep["be1"]),
            resident(prep["g2"]), resident(prep["be2"]),
        ],
        out_specs=pl.BlockSpec((tb, 1), lambda i: (i, 0)),
        compiler_params=pltpu.CompilerParams(
            dimension_semantics=("parallel",),
            vmem_limit_bytes=32 * 1024 * 1024,
        ),
    )(states, actions,
      prep["w1"], prep["b1"],
      prep["w2a"], prep["w2b"], prep["b2"],
      prep["w3"], prep["b3"],
      prep["g0"], prep["be0"],
      prep["g1"], prep["be1"],
      prep["g2"], prep["be2"])

    return out


def make_params(key, input_dims, n_actions, fc1_dims, fc2_dims):
    """Synthetic init mimicking the module's uniform init.  PyTorch fc weights
    are [out, in]; we store the transpose [in, out].  LayerNorm params use the
    PyTorch default init (weight=1, bias=0)."""
    k = jax.random.split(key, 6)
    f1 = 1.0 / (fc1_dims ** 0.5)          # fc1.weight.size()[0]
    f2 = 1.0 / (fc2_dims ** 0.5)          # fc2.weight.size()[0]
    f3 = f2                               # same bound as in the module
    u = lambda kk, shape, b: jax.random.uniform(kk, shape, jnp.float32, -b, b)
    w2 = u(k[2], (fc1_dims + n_actions, fc2_dims), f2)
    return {
        "w1": u(k[0], (input_dims, fc1_dims), f1),
        "b1": u(k[1], (1, fc1_dims), f1),
        "w2a": w2[:fc1_dims, :],
        "w2b": w2[fc1_dims:, :],
        "b2": u(k[3], (1, fc2_dims), f2),
        "w3": u(k[4], (fc2_dims, 1), f3),
        "b3": u(k[5], (1, 1), f3),
        "g0": jnp.ones((1, input_dims), jnp.float32),
        "be0": jnp.zeros((1, input_dims), jnp.float32),
        "g1": jnp.ones((1, fc1_dims), jnp.float32),
        "be1": jnp.zeros((1, fc1_dims), jnp.float32),
        "g2": jnp.ones((1, fc2_dims), jnp.float32),
        "be2": jnp.zeros((1, fc2_dims), jnp.float32),
    }


def _layernorm_ref(x, gamma, beta):
    mu = jnp.mean(x, axis=-1, keepdims=True)
    var = jnp.mean((x - mu) * (x - mu), axis=-1, keepdims=True)
    return (x - mu) * lax.rsqrt(var + LN_EPS) * gamma + beta


def critic_reference(states, actions, p):
    """Pure-JAX reference matching the PyTorch forward exactly."""
    s = _layernorm_ref(states, p["g0"], p["be0"])
    h1 = s @ p["w1"] + p["b1"]
    h1 = jnp.maximum(_layernorm_ref(h1, p["g1"], p["be1"]), 0.0)
    x2 = jnp.concatenate([h1, actions], axis=1)
    w2 = jnp.concatenate([p["w2a"], p["w2b"]], axis=0)
    h2 = jnp.maximum(_layernorm_ref(x2 @ w2 + p["b2"], p["g2"], p["be2"]), 0.0)
    return h2 @ p["w3"] + p["b3"]


if __name__ == "__main__":
    # Small stand-ins for the (400, 300) defaults; deliberately non-multiples
    # of 128 so the unpadded-input + lane-padded-hidden + true-count LayerNorm
    # path is exercised.
    input_dims, n_actions = 24, 6
    fc1_dims, fc2_dims = 48, 40

    key = jax.random.PRNGKey(0)
    kp, ks1, ka1, ks2, ka2 = jax.random.split(key, 5)
    params = make_params(kp, input_dims, n_actions, fc1_dims, fc2_dims)

    # One-time weight prep (hoisted out of the per-call path).
    prep_f32 = prepare_params(params, mxu_dtype=jnp.float32)   # exactness check
    prep_bf16 = prepare_params(params)                         # default: bf16 MXU operands

    # --- small batch (single grid tile) ---
    s1 = jax.random.normal(ks1, (8, input_dims), jnp.float32)
    a1 = jax.random.normal(ka1, (8, n_actions), jnp.float32)
    out1 = critic_forward(s1, a1, prep_f32)
    jax.block_until_ready(out1)
    ref1 = critic_reference(s1, a1, params)
    assert out1.shape == (8, 1)
    assert jnp.allclose(out1, ref1, atol=5e-4, rtol=5e-4), "f32 mismatch (small batch)"

    # --- larger batch exercising the batch grid (multiple tiles + partial last tile) ---
    s2 = jax.random.normal(ks2, (300, input_dims), jnp.float32)
    a2 = jax.random.normal(ka2, (300, n_actions), jnp.float32)
    out2 = critic_forward(s2, a2, prep_f32, block_batch=128)
    jax.block_until_ready(out2)
    ref2 = critic_reference(s2, a2, params)
    assert out2.shape == (300, 1)
    assert jnp.allclose(out2, ref2, atol=5e-4, rtol=5e-4), "f32 mismatch (tiled batch)"

    # --- default path: bf16 MXU operands, f32 accumulation/LN (intentional
    #     accuracy trade for an RL critic; hence the loose tolerance) ---
    out3 = critic_forward(s2, a2, prep_bf16)
    jax.block_until_ready(out3)
    assert out3.shape == (300, 1)
    assert jnp.allclose(out3, ref2, atol=2.5e-1, rtol=2.5e-1), "bf16 mismatch"

    # TODO(synk): Adam optimizer state and checkpoint save/load are host-side
    # and not part of the forward pass; not implemented as kernels.
    print("KERNEL_OK")
</pallas_src>

<mosaic_0001>
module attributes {stable_mosaic.version = 11 : i64} {
  func.func @_critic_kernel(%arg0: i32, %arg1: memref<8x24xf32, #tpu.memory_space<vmem>>, %arg2: memref<8x6xf32, #tpu.memory_space<vmem>>, %arg3: memref<24x128xf32, #tpu.memory_space<vmem>>, %arg4: memref<1x128xf32, #tpu.memory_space<vmem>>, %arg5: memref<128x128xf32, #tpu.memory_space<vmem>>, %arg6: memref<6x128xf32, #tpu.memory_space<vmem>>, %arg7: memref<1x128xf32, #tpu.memory_space<vmem>>, %arg8: memref<1x128xf32, #tpu.memory_space<vmem>>, %arg9: memref<1x1xf32, #tpu.memory_space<vmem>>, %arg10: memref<1x24xf32, #tpu.memory_space<vmem>>, %arg11: memref<1x24xf32, #tpu.memory_space<vmem>>, %arg12: memref<1x128xf32, #tpu.memory_space<vmem>>, %arg13: memref<1x128xf32, #tpu.memory_space<vmem>>, %arg14: memref<1x128xf32, #tpu.memory_space<vmem>>, %arg15: memref<1x128xf32, #tpu.memory_space<vmem>>, %arg16: memref<8x1xf32, #tpu.memory_space<vmem>>) attributes {dimension_semantics = [#tpu.dimension_semantics<parallel>], iteration_bounds = array<i64: 1>, scalar_prefetch = 0 : i64, scratch_operands = 0 : i64, tpu.core_type = #tpu.core_type<tc>, window_params = [{transform_indices = @transform_0, window_bounds = array<i64: 8, 24>}, {transform_indices = @transform_1, window_bounds = array<i64: 8, 6>}, {pipeline_mode = #tpu.pipeline_mode<synchronous>, transform_indices = @transform_2, window_bounds = array<i64: 24, 128>}, {pipeline_mode = #tpu.pipeline_mode<synchronous>, transform_indices = @transform_3, window_bounds = array<i64: 1, 128>}, {pipeline_mode = #tpu.pipeline_mode<synchronous>, transform_indices = @transform_4, window_bounds = array<i64: 128, 128>}, {pipeline_mode = #tpu.pipeline_mode<synchronous>, transform_indices = @transform_5, window_bounds = array<i64: 6, 128>}, {pipeline_mode = #tpu.pipeline_mode<synchronous>, transform_indices = @transform_6, window_bounds = array<i64: 1, 128>}, {pipeline_mode = #tpu.pipeline_mode<synchronous>, transform_indices = @transform_7, window_bounds = array<i64: 1, 128>}, {pipeline_mode = #tpu.pipeline_mode<synchronous>, transform_indices = @transform_8, window_bounds = array<i64: 1, 1>}, {pipeline_mode = #tpu.pipeline_mode<synchronous>, transform_indices = @transform_9, window_bounds = array<i64: 1, 24>}, {pipeline_mode = #tpu.pipeline_mode<synchronous>, transform_indices = @transform_10, window_bounds = array<i64: 1, 24>}, {pipeline_mode = #tpu.pipeline_mode<synchronous>, transform_indices = @transform_11, window_bounds = array<i64: 1, 128>}, {pipeline_mode = #tpu.pipeline_mode<synchronous>, transform_indices = @transform_12, window_bounds = array<i64: 1, 128>}, {pipeline_mode = #tpu.pipeline_mode<synchronous>, transform_indices = @transform_13, window_bounds = array<i64: 1, 128>}, {pipeline_mode = #tpu.pipeline_mode<synchronous>, transform_indices = @transform_14, window_bounds = array<i64: 1, 128>}, {transform_indices = @transform_15, window_bounds = array<i64: 8, 1>}]} {
    %c0 = arith.constant 0 : index
    %c0_0 = arith.constant 0 : index
    %0 = vector.load %arg1[%c0, %c0_0] : memref<8x24xf32, #tpu.memory_space<vmem>>, vector<8x24xf32>
    %c0_1 = arith.constant 0 : index
    %c0_2 = arith.constant 0 : index
    %1 = vector.load %arg10[%c0_1, %c0_2] : memref<1x24xf32, #tpu.memory_space<vmem>>, vector<1x24xf32>
    %c0_3 = arith.constant 0 : index
    %c0_4 = arith.constant 0 : index
    %2 = vector.load %arg11[%c0_3, %c0_4] : memref<1x24xf32, #tpu.memory_space<vmem>>, vector<1x24xf32>
    %cst = arith.constant dense<0.000000e+00> : vector<8xf32>
    %3 = vector.multi_reduction <add>, %0, %cst [1] : vector<8x24xf32> to vector<8xf32>
    %4 = vector.shape_cast %3 : vector<8xf32> to vector<8x1xf32>
    %5 = arith.mulf %0, %0 : vector<8x24xf32>
    %cst_5 = arith.constant dense<0.000000e+00> : vector<8xf32>
    %6 = vector.multi_reduction <add>, %5, %cst_5 [1] : vector<8x24xf32> to vector<8xf32>
    %7 = vector.shape_cast %6 : vector<8xf32> to vector<8x1xf32>
    %cst_6 = arith.constant 0.0416666679 : f32
    %8 = vector.broadcast %cst_6 : f32 to vector<8x1xf32>
    %9 = arith.mulf %4, %8 : vector<8x1xf32>
    %cst_7 = arith.constant 0.0416666679 : f32
    %10 = vector.broadcast %cst_7 : f32 to vector<8x1xf32>
    %11 = arith.mulf %7, %10 : vector<8x1xf32>
    %12 = arith.mulf %9, %9 : vector<8x1xf32>
    %13 = arith.subf %11, %12 : vector<8x1xf32>
    %cst_8 = arith.constant 0.000000e+00 : f32
    %14 = vector.broadcast %cst_8 : f32 to vector<8x1xf32>
    %15 = arith.maximumf %13, %14 : vector<8x1xf32>
    %16 = vector.broadcast %9 : vector<8x1xf32> to vector<8x24xf32>
    %17 = arith.subf %0, %16 : vector<8x24xf32>
    %cst_9 = arith.constant 9.99999974E-6 : f32
    %18 = vector.broadcast %cst_9 : f32 to vector<8x1xf32>
    %19 = arith.addf %15, %18 : vector<8x1xf32>
    %20 = math.rsqrt %19 : vector<8x1xf32>
    %21 = vector.broadcast %20 : vector<8x1xf32> to vector<8x24xf32>
    %22 = arith.mulf %17, %21 : vector<8x24xf32>
    %23 = vector.broadcast %1 : vector<1x24xf32> to vector<8x24xf32>
    %24 = arith.mulf %22, %23 : vector<8x24xf32>
    %25 = vector.broadcast %2 : vector<1x24xf32> to vector<8x24xf32>
    %26 = arith.addf %24, %25 : vector<8x24xf32>
    %c0_10 = arith.constant 0 : index
    %c0_11 = arith.constant 0 : index
    %27 = vector.load %arg3[%c0_10, %c0_11] : memref<24x128xf32, #tpu.memory_space<vmem>>, vector<24x128xf32>
    %cst_12 = arith.constant dense<0.000000e+00> : vector<8x128xf32>
    %28 = tpu.matmul %26, %27, %cst_12 {dimension_numbers = #tpu.dot_dimension_numbers<[1], [0], [0], [1], [0, 0, 1, 1], [], []>} : vector<8x24xf32>, vector<24x128xf32>, vector<8x128xf32> -> vector<8x128xf32>
    %c0_13 = arith.constant 0 : index
    %c0_14 = arith.constant 0 : index
    %29 = vector.load %arg4[%c0_13, %c0_14] : memref<1x128xf32, #tpu.memory_space<vmem>>, vector<1x128xf32>
    %30 = vector.broadcast %29 : vector<1x128xf32> to vector<8x128xf32>
    %31 = arith.addf %28, %30 : vector<8x128xf32>
    %c0_15 = arith.constant 0 : index
    %c0_16 = arith.constant 0 : index
    %32 = vector.load %arg12[%c0_15, %c0_16] : memref<1x128xf32, #tpu.memory_space<vmem>>, vector<1x128xf32>
    %c0_17 = arith.constant 0 : index
    %c0_18 = arith.constant 0 : index
    %33 = vector.load %arg13[%c0_17, %c0_18] : memref<1x128xf32, #tpu.memory_space<vmem>>, vector<1x128xf32>
    %cst_19 = arith.constant dense<0.000000e+00> : vector<8xf32>
    %34 = vector.multi_reduction <add>, %31, %cst_19 [1] : vector<8x128xf32> to vector<8xf32>
    %35 = vector.shape_cast %34 : vector<8xf32> to vector<8x1xf32>
    %36 = arith.mulf %31, %31 : vector<8x128xf32>
    %cst_20 = arith.constant dense<0.000000e+00> : vector<8xf32>
    %37 = vector.multi_reduction <add>, %36, %cst_20 [1] : vector<8x128xf32> to vector<8xf32>
    %38 = vector.shape_cast %37 : vector<8xf32> to vector<8x1xf32>
    %cst_21 = arith.constant 0.020833334 : f32
    %39 = vector.broadcast %cst_21 : f32 to vector<8x1xf32>
    %40 = arith.mulf %35, %39 : vector<8x1xf32>
    %cst_22 = arith.constant 0.020833334 : f32
    %41 = vector.broadcast %cst_22 : f32 to vector<8x1xf32>
    %42 = arith.mulf %38, %41 : vector<8x1xf32>
    %43 = arith.mulf %40, %40 : vector<8x1xf32>
    %44 = arith.subf %42, %43 : vector<8x1xf32>
    %cst_23 = arith.constant 0.000000e+00 : f32
    %45 = vector.broadcast %cst_23 : f32 to vector<8x1xf32>
    %46 = arith.maximumf %44, %45 : vector<8x1xf32>
    %47 = vector.broadcast %40 : vector<8x1xf32> to vector<8x128xf32>
    %48 = arith.subf %31, %47 : vector<8x128xf32>
    %cst_24 = arith.constant 9.99999974E-6 : f32
    %49 = vector.broadcast %cst_24 : f32 to vector<8x1xf32>
    %50 = arith.addf %46, %49 : vector<8x1xf32>
    %51 = math.rsqrt %50 : vector<8x1xf32>
    %52 = vector.broadcast %51 : vector<8x1xf32> to vector<8x128xf32>
    %53 = arith.mulf %48, %52 : vector<8x128xf32>
    %54 = vector.broadcast %32 : vector<1x128xf32> to vector<8x128xf32>
    %55 = arith.mulf %53, %54 : vector<8x128xf32>
    %56 = vector.broadcast %33 : vector<1x128xf32> to vector<8x128xf32>
    %57 = arith.addf %55, %56 : vector<8x128xf32>
    %cst_25 = arith.constant 0.000000e+00 : f32
    %58 = vector.broadcast %cst_25 : f32 to vector<8x128xf32>
    %59 = arith.maximumf %57, %58 : vector<8x128xf32>
    %c0_26 = arith.constant 0 : index
    %c0_27 = arith.constant 0 : index
    %60 = vector.load %arg5[%c0_26, %c0_27] : memref<128x128xf32, #tpu.memory_space<vmem>>, vector<128x128xf32>
    %cst_28 = arith.constant dense<0.000000e+00> : vector<8x128xf32>
    %61 = tpu.matmul %59, %60, %cst_28 {dimension_numbers = #tpu.dot_dimension_numbers<[1], [0], [0], [1], [0, 0, 1, 1], [], []>} : vector<8x128xf32>, vector<128x128xf32>, vector<8x128xf32> -> vector<8x128xf32>
    %c0_29 = arith.constant 0 : index
    %c0_30 = arith.constant 0 : index
    %62 = vector.load %arg2[%c0_29, %c0_30] : memref<8x6xf32, #tpu.memory_space<vmem>>, vector<8x6xf32>
    %c0_31 = arith.constant 0 : index
    %c0_32 = arith.constant 0 : index
    %63 = vector.load %arg6[%c0_31, %c0_32] : memref<6x128xf32, #tpu.memory_space<vmem>>, vector<6x128xf32>
    %cst_33 = arith.constant dense<0.000000e+00> : vector<8x128xf32>
    %64 = tpu.matmul %62, %63, %cst_33 {dimension_numbers = #tpu.dot_dimension_numbers<[1], [0], [0], [1], [0, 0, 1, 1], [], []>} : vector<8x6xf32>, vector<6x128xf32>, vector<8x128xf32> -> vector<8x128xf32>
    %65 = arith.addf %61, %64 : vector<8x128xf32>
    %c0_34 = arith.constant 0 : index
    %c0_35 = arith.constant 0 : index
    %66 = vector.load %arg7[%c0_34, %c0_35] : memref<1x128xf32, #tpu.memory_space<vmem>>, vector<1x128xf32>
    %67 = vector.broadcast %66 : vector<1x128xf32> to vector<8x128xf32>
    %68 = arith.addf %65, %67 : vector<8x128xf32>
    %c0_36 = arith.constant 0 : index
    %c0_37 = arith.constant 0 : index
    %69 = vector.load %arg14[%c0_36, %c0_37] : memref<1x128xf32, #tpu.memory_space<vmem>>, vector<1x128xf32>
    %c0_38 = arith.constant 0 : index
    %c0_39 = arith.constant 0 : index
    %70 = vector.load %arg15[%c0_38, %c0_39] : memref<1x128xf32, #tpu.memory_space<vmem>>, vector<1x128xf32>
    %cst_40 = arith.constant dense<0.000000e+00> : vector<8xf32>
    %71 = vector.multi_reduction <add>, %68, %cst_40 [1] : vector<8x128xf32> to vector<8xf32>
    %72 = vector.shape_cast %71 : vector<8xf32> to vector<8x1xf32>
    %73 = arith.mulf %68, %68 : vector<8x128xf32>
    %cst_41 = arith.constant dense<0.000000e+00> : vector<8xf32>
    %74 = vector.multi_reduction <add>, %73, %cst_41 [1] : vector<8x128xf32> to vector<8xf32>
    %75 = vector.shape_cast %74 : vector<8xf32> to vector<8x1xf32>
    %cst_42 = arith.constant 2.500000e-02 : f32
    %76 = vector.broadcast %cst_42 : f32 to vector<8x1xf32>
    %77 = arith.mulf %72, %76 : vector<8x1xf32>
    %cst_43 = arith.constant 2.500000e-02 : f32
    %78 = vector.broadcast %cst_43 : f32 to vector<8x1xf32>
    %79 = arith.mulf %75, %78 : vector<8x1xf32>
    %80 = arith.mulf %77, %77 : vector<8x1xf32>
    %81 = arith.subf %79, %80 : vector<8x1xf32>
    %cst_44 = arith.constant 0.000000e+00 : f32
    %82 = vector.broadcast %cst_44 : f32 to vector<8x1xf32>
    %83 = arith.maximumf %81, %82 : vector<8x1xf32>
    %84 = vector.broadcast %77 : vector<8x1xf32> to vector<8x128xf32>
    %85 = arith.subf %68, %84 : vector<8x128xf32>
    %cst_45 = arith.constant 9.99999974E-6 : f32
    %86 = vector.broadcast %cst_45 : f32 to vector<8x1xf32>
    %87 = arith.addf %83, %86 : vector<8x1xf32>
    %88 = math.rsqrt %87 : vector<8x1xf32>
    %89 = vector.broadcast %88 : vector<8x1xf32> to vector<8x128xf32>
    %90 = arith.mulf %85, %89 : vector<8x128xf32>
    %91 = vector.broadcast %69 : vector<1x128xf32> to vector<8x128xf32>
    %92 = arith.mulf %90, %91 : vector<8x128xf32>
    %93 = vector.broadcast %70 : vector<1x128xf32> to vector<8x128xf32>
    %94 = arith.addf %92, %93 : vector<8x128xf32>
    %cst_46 = arith.constant 0.000000e+00 : f32
    %95 = vector.broadcast %cst_46 : f32 to vector<8x128xf32>
    %96 = arith.maximumf %94, %95 : vector<8x128xf32>
    %c0_47 = arith.constant 0 : index
    %c0_48 = arith.constant 0 : index
    %97 = vector.load %arg8[%c0_47, %c0_48] : memref<1x128xf32, #tpu.memory_space<vmem>>, vector<1x128xf32>
    %98 = vector.broadcast %97 : vector<1x128xf32> to vector<8x128xf32>
    %99 = arith.mulf %96, %98 : vector<8x128xf32>
    %cst_49 = arith.constant dense<0.000000e+00> : vector<8xf32>
    %100 = vector.multi_reduction <add>, %99, %cst_49 [1] : vector<8x128xf32> to vector<8xf32>
    %101 = vector.shape_cast %100 : vector<8xf32> to vector<8x1xf32>
    %c0_50 = arith.constant 0 : index
    %c0_51 = arith.constant 0 : index
    %102 = vector.load %arg9[%c0_50, %c0_51] : memref<1x1xf32, #tpu.memory_space<vmem>>, vector<1x1xf32>
    %103 = vector.broadcast %102 : vector<1x1xf32> to vector<8x1xf32>
    %104 = arith.addf %101, %103 : vector<8x1xf32>
    %c0_52 = arith.constant 0 : index
    %c0_53 = arith.constant 0 : index
    %105 = vector.load %arg16[%c0_52, %c0_53] : memref<8x1xf32, #tpu.memory_space<vmem>>, vector<8x1xf32>
    tpu.vector_store %arg16[%c0_52, %c0_53], %104 {strides = array<i32>} : memref<8x1xf32, #tpu.memory_space<vmem>>, vector<8x1xf32>,
    return
  }
  func.func @transform_0(%arg0: i32) -> (i32, i32) {
    %c0_i32 = arith.constant 0 : i32
    %c0_i32_0 = arith.constant 0 : i32
    return %arg0, %c0_i32 : i32, i32
  }
  func.func @transform_1(%arg0: i32) -> (i32, i32) {
    %c0_i32 = arith.constant 0 : i32
    %c0_i32_0 = arith.constant 0 : i32
    return %arg0, %c0_i32 : i32, i32
  }
  func.func @transform_2(%arg0: i32) -> (i32, i32) {
    %c0_i32 = arith.constant 0 : i32
    %c0_i32_0 = arith.constant 0 : i32
    %c0_i32_1 = arith.constant 0 : i32
    return %c0_i32, %c0_i32_0 : i32, i32
  }
  func.func @transform_3(%arg0: i32) -> (i32, i32) {
    %c0_i32 = arith.constant 0 : i32
    %c0_i32_0 = arith.constant 0 : i32
    %c0_i32_1 = arith.constant 0 : i32
    return %c0_i32, %c0_i32_0 : i32, i32
  }
  func.func @transform_4(%arg0: i32) -> (i32, i32) {
    %c0_i32 = arith.constant 0 : i32
    %c0_i32_0 = arith.constant 0 : i32
    %c0_i32_1 = arith.constant 0 : i32
    return %c0_i32, %c0_i32_0 : i32, i32
  }
  func.func @transform_5(%arg0: i32) -> (i32, i32) {
    %c0_i32 = arith.constant 0 : i32
    %c0_i32_0 = arith.constant 0 : i32
    %c0_i32_1 = arith.constant 0 : i32
    return %c0_i32, %c0_i32_0 : i32, i32
  }
  func.func @transform_6(%arg0: i32) -> (i32, i32) {
    %c0_i32 = arith.constant 0 : i32
    %c0_i32_0 = arith.constant 0 : i32
    %c0_i32_1 = arith.constant 0 : i32
    return %c0_i32, %c0_i32_0 : i32, i32
  }
  func.func @transform_7(%arg0: i32) -> (i32, i32) {
    %c0_i32 = arith.constant 0 : i32
    %c0_i32_0 = arith.constant 0 : i32
    %c0_i32_1 = arith.constant 0 : i32
    return %c0_i32, %c0_i32_0 : i32, i32
  }
  func.func @transform_8(%arg0: i32) -> (i32, i32) {
    %c0_i32 = arith.constant 0 : i32
    %c0_i32_0 = arith.constant 0 : i32
    %c0_i32_1 = arith.constant 0 : i32
    return %c0_i32, %c0_i32_0 : i32, i32
  }
  func.func @transform_9(%arg0: i32) -> (i32, i32) {
    %c0_i32 = arith.constant 0 : i32
    %c0_i32_0 = arith.constant 0 : i32
    %c0_i32_1 = arith.constant 0 : i32
    return %c0_i32, %c0_i32_0 : i32, i32
  }
  func.func @transform_10(%arg0: i32) -> (i32, i32) {
    %c0_i32 = arith.constant 0 : i32
    %c0_i32_0 = arith.constant 0 : i32
    %c0_i32_1 = arith.constant 0 : i32
    return %c0_i32, %c0_i32_0 : i32, i32
  }
  func.func @transform_11(%arg0: i32) -> (i32, i32) {
    %c0_i32 = arith.constant 0 : i32
    %c0_i32_0 = arith.constant 0 : i32
    %c0_i32_1 = arith.constant 0 : i32
    return %c0_i32, %c0_i32_0 : i32, i32
  }
  func.func @transform_12(%arg0: i32) -> (i32, i32) {
    %c0_i32 = arith.constant 0 : i32
    %c0_i32_0 = arith.constant 0 : i32
    %c0_i32_1 = arith.constant 0 : i32
    return %c0_i32, %c0_i32_0 : i32, i32
  }
  func.func @transform_13(%arg0: i32) -> (i32, i32) {
    %c0_i32 = arith.constant 0 : i32
    %c0_i32_0 = arith.constant 0 : i32
    %c0_i32_1 = arith.constant 0 : i32
    return %c0_i32, %c0_i32_0 : i32, i32
  }
  func.func @transform_14(%arg0: i32) -> (i32, i32) {
    %c0_i32 = arith.constant 0 : i32
    %c0_i32_0 = arith.constant 0 : i32
    %c0_i32_1 = arith.constant 0 : i32
    return %c0_i32, %c0_i32_0 : i32, i32
  }
  func.func @transform_15(%arg0: i32) -> (i32, i32) {
    %c0_i32 = arith.constant 0 : i32
    %c0_i32_0 = arith.constant 0 : i32
    return %arg0, %c0_i32 : i32, i32
  }
}

</mosaic_0001>

<llo_original>
// kernel: tpu_custom_call.1
$region0: #{tpu_custom_call.1}
  #allocation0 [shape = 'u32[]', space=smem, size = 0x4, offset = 0x4, fixed_abs, tag = 'smem constant byte address 0x4 - core index']
  #allocation1 [shape = 'u32[144,128]{1,0:T(1,128)}', space=vmem, size = 0x12000, scoped, tag = 'internal scratch']
  #allocation2 [shape = 'f32[1,1]{1,0:T(1,128)S(1)}', space=vmem, size = 0x200, scoped, tag = 'scoped memory for tpu_custom_call.1']
  %s0 = inlined_call_operand.hbm [shape: f32[8,24], index: 0, kind: input, shape index: {}]
  %s1 = inlined_call_operand.hbm [shape: f32[8,6], index: 1, kind: input, shape index: {}]
  %s2 = inlined_call_operand.hbm [shape: f32[24,128], index: 2, kind: input, shape index: {}]
  %s3 = inlined_call_operand.vmem [shape: f32[1,128], index: 3, kind: input, shape index: {}]
  %s4 = inlined_call_operand.hbm [shape: f32[128,128], index: 4, kind: input, shape index: {}]
  %s5 = inlined_call_operand.vmem [shape: f32[6,128], index: 5, kind: input, shape index: {}]
  %s6 = inlined_call_operand.vmem [shape: f32[1,128], index: 6, kind: input, shape index: {}]
  %s7 = inlined_call_operand.vmem [shape: f32[1,128], index: 7, kind: input, shape index: {}]
  %s8 = inlined_call_operand.<no memory space> [shape: f32[1,1], index: 8, kind: input, shape index: {}]
  %s9 = inlined_call_operand.vmem [shape: f32[1,24], index: 9, kind: input, shape index: {}]
  %s10 = inlined_call_operand.vmem [shape: f32[1,24], index: 10, kind: input, shape index: {}]
  %s11 = inlined_call_operand.vmem [shape: f32[1,128], index: 11, kind: input, shape index: {}]
  %s12 = inlined_call_operand.vmem [shape: f32[1,128], index: 12, kind: input, shape index: {}]
  %s13 = inlined_call_operand.vmem [shape: f32[1,128], index: 13, kind: input, shape index: {}]
  %s14 = inlined_call_operand.vmem [shape: f32[1,128], index: 14, kind: input, shape index: {}]
  %s15 = inlined_call_operand.vmem [shape: f32[8,1], index: 15, kind: output, shape index: {}]
  %s16 = sld [smem:[#allocation0]]
  $region86: #{tpu_custom_call.1} parent=0
    _
  %s18 = ssub.s32 1, %s16
  %s19 = scalar_select 0, %s18, %s16
  %v20 = vstv %s8
  %21 = vst [vmem:[#allocation2] sm:$0x1] %v20
  $region1: #{tpu_custom_call.1} parent=0
    #allocation3 [shape = 'u8[4096]{0}', space=vmem, size = 0x1000, scoped, tag = 'input window, operand 0, single buffered']
    #allocation4 [shape = 's32[1]{0}', space=sflag, size = 0x4, scoped, tag = 'scoped memory for tpu_custom_call.1']
    #allocation5 [shape = 'u8[4096]{0}', space=vmem, size = 0x1000, scoped, tag = 'input window, operand 1, single buffered']
    #allocation6 [shape = 's32[1]{0}', space=sflag, size = 0x4, scoped, tag = 'scoped memory for tpu_custom_call.1']
    #allocation7 [shape = 'u8[12288]{0}', space=vmem, size = 0x3000, scoped, tag = 'input window, operand 2, single buffered']
    #allocation8 [shape = 'u8[65536]{0}', space=vmem, size = 0x10000, scoped, tag = 'input window, operand 4, single buffered']
    #allocation9 [shape = 's32[1]{0}', space=sflag, size = 0x4, scoped, tag = 'scoped memory for tpu_custom_call.1']
    %22 = vsyncpa [#allocation4], 0
    %23 = vsyncpa [#allocation6], 0
    %24 = vsyncpa [#allocation9], 0
    // Predicated region
    $region2: #{tpu_custom_call.1} parent=1 // pred_check
      _
    $region3: #{tpu_custom_call.1} parent=1 // pred_check_branch
      %26 = sbr.rel (0) target = $region5
    $region4: #{tpu_custom_call.1} parent=1 // pred_region
      %s28 = ssub.s32 128, 128
      %29 = vsyncadd [#allocation4], %s28
      %s31 = sshll.u32 [#allocation3], 4
      %s32 = int_to_ptr.vmem [resolvable:$true] %s31
      %34 = dma.hbm_to_vmem [thread:$0]  %s0, 128, %s32, [#allocation4]
    $region5: #{tpu_custom_call.1} parent=1 // pred_fallthru
      _
    // Predicated region
    $region6: #{tpu_custom_call.1} parent=1 // pred_check
      _
    $region7: #{tpu_custom_call.1} parent=1 // pred_check_branch
      %36 = sbr.rel (0) target = $region9
    $region8: #{tpu_custom_call.1} parent=1 // pred_region
      %s38 = ssub.s32 128, 128
      %39 = vsyncadd [#allocation6], %s38
      %s41 = sshll.u32 [#allocation5], 4
      %s42 = int_to_ptr.vmem [resolvable:$true] %s41
      %44 = dma.hbm_to_vmem [thread:$0]  %s1, 128, %s42, [#allocation6]
    $region9: #{tpu_custom_call.1} parent=1 // pred_fallthru
      _
    // Predicated region
    $region10: #{tpu_custom_call.1} parent=1 // pred_check
      _
    $region11: #{tpu_custom_call.1} parent=1 // pred_check_branch
      %46 = sbr.rel (0) target = $region13
    $region12: #{tpu_custom_call.1} parent=1 // pred_region
      %s48 = ssub.s32 384, 384
      %49 = vsyncadd [#allocation6], %s48
      %s50 = sshll.u32 [#allocation7], 4
      %s51 = int_to_ptr.vmem [resolvable:$true] %s50
      %56 = dma.hbm_to_vmem [thread:$0]  %s2, 384, %s51, [#allocation6], 128, 128, 8
    $region13: #{tpu_custom_call.1} parent=1 // pred_fallthru
      _
    // Predicated region
    $region14: #{tpu_custom_call.1} parent=1 // pred_check
      _
    $region15: #{tpu_custom_call.1} parent=1 // pred_check_branch
      %58 = sbr.rel (0) target = $region17
    $region16: #{tpu_custom_call.1} parent=1 // pred_region
      _
    $region17: #{tpu_custom_call.1} parent=1 // pred_fallthru
      _
    // Predicated region
    $region18: #{tpu_custom_call.1} parent=1 // pred_check
      _
    $region19: #{tpu_custom_call.1} parent=1 // pred_check_branch
      %60 = sbr.rel (0) target = $region21
    $region20: #{tpu_custom_call.1} parent=1 // pred_region
      %s62 = ssub.s32 2048, 2048
      %63 = vsyncadd [#allocation9], %s62
      %s64 = sshll.u32 [#allocation8], 4
      %s65 = int_to_ptr.vmem [resolvable:$true] %s64
      %70 = dma.hbm_to_vmem [thread:$0]  %s4, 2048, %s65, [#allocation9], 128, 128, 8
    $region21: #{tpu_custom_call.1} parent=1 // pred_fallthru
      _
    // Predicated region
    $region22: #{tpu_custom_call.1} parent=1 // pred_check
      _
    $region23: #{tpu_custom_call.1} parent=1 // pred_check_branch
      %72 = sbr.rel (0) target = $region25
    $region24: #{tpu_custom_call.1} parent=1 // pred_region
      _
    $region25: #{tpu_custom_call.1} parent=1 // pred_fallthru
      _
    // Predicated region
    $region26: #{tpu_custom_call.1} parent=1 // pred_check
      _
    $region27: #{tpu_custom_call.1} parent=1 // pred_check_branch
      %74 = sbr.rel (0) target = $region29
    $region28: #{tpu_custom_call.1} parent=1 // pred_region
      _
    $region29: #{tpu_custom_call.1} parent=1 // pred_fallthru
      _
    // Predicated region
    $region30: #{tpu_custom_call.1} parent=1 // pred_check
      _
    $region31: #{tpu_custom_call.1} parent=1 // pred_check_branch
      %76 = sbr.rel (0) target = $region33
    $region32: #{tpu_custom_call.1} parent=1 // pred_region
      _
    $region33: #{tpu_custom_call.1} parent=1 // pred_fallthru
      _
    // Predicated region
    $region34: #{tpu_custom_call.1} parent=1 // pred_check
      _
    $region35: #{tpu_custom_call.1} parent=1 // pred_check_branch
      %78 = sbr.rel (0) target = $region37
    $region36: #{tpu_custom_call.1} parent=1 // pred_region
      _
    $region37: #{tpu_custom_call.1} parent=1 // pred_fallthru
      _
    // Predicated region
    $region38: #{tpu_custom_call.1} parent=1 // pred_check
      _
    $region39: #{tpu_custom_call.1} parent=1 // pred_check_branch
      %80 = sbr.rel (0) target = $region41
    $region40: #{tpu_custom_call.1} parent=1 // pred_region
      _
    $region41: #{tpu_custom_call.1} parent=1 // pred_fallthru
      _
    // Predicated region
    $region42: #{tpu_custom_call.1} parent=1 // pred_check
      _
    $region43: #{tpu_custom_call.1} parent=1 // pred_check_branch
      %82 = sbr.rel (0) target = $region45
    $region44: #{tpu_custom_call.1} parent=1 // pred_region
      _
    $region45: #{tpu_custom_call.1} parent=1 // pred_fallthru
      _
    // Predicated region
    $region46: #{tpu_custom_call.1} parent=1 // pred_check
      _
    $region47: #{tpu_custom_call.1} parent=1 // pred_check_branch
      %84 = sbr.rel (0) target = $region49
    $region48: #{tpu_custom_call.1} parent=1 // pred_region
      _
    $region49: #{tpu_custom_call.1} parent=1 // pred_fallthru
      _
    // Predicated region
    $region50: #{tpu_custom_call.1} parent=1 // pred_check
      _
    $region51: #{tpu_custom_call.1} parent=1 // pred_check_branch
      %86 = sbr.rel (0) target = $region53
    $region52: #{tpu_custom_call.1} parent=1 // pred_region
      _
    $region53: #{tpu_custom_call.1} parent=1 // pred_fallthru
      _
    // Predicated region
    $region54: #{tpu_custom_call.1} parent=1 // pred_check
      _
    $region55: #{tpu_custom_call.1} parent=1 // pred_check_branch
      %88 = sbr.rel (0) target = $region57
    $region56: #{tpu_custom_call.1} parent=1 // pred_region
      _
    $region57: #{tpu_custom_call.1} parent=1 // pred_fallthru
      _
    // Predicated region
    $region58: #{tpu_custom_call.1} parent=1 // pred_check
      _
    $region59: #{tpu_custom_call.1} parent=1 // pred_check_branch
      %90 = sbr.rel (0) target = $region61
    $region60: #{tpu_custom_call.1} parent=1 // pred_region
      _
    $region61: #{tpu_custom_call.1} parent=1 // pred_fallthru
      _
    // Predicated region
    $region62: #{tpu_custom_call.1} parent=1 // pred_check
      _
    $region63: #{tpu_custom_call.1} parent=1 // pred_check_branch
      %92 = sbr.rel (0) target = $region65
    $region64: #{tpu_custom_call.1} parent=1 // pred_region
      %93 = dma.done [#allocation4], 128
    $region65: #{tpu_custom_call.1} parent=1 // pred_fallthru
      _
    // Predicated region
    $region66: #{tpu_custom_call.1} parent=1 // pred_check
      _
    $region67: #{tpu_custom_call.1} parent=1 // pred_check_branch
      %95 = sbr.rel (0) target = $region69
    $region68: #{tpu_custom_call.1} parent=1 // pred_region
      %96 = dma.done [#allocation6], 128
    $region69: #{tpu_custom_call.1} parent=1 // pred_fallthru
      _
    // Predicated region
    $region70: #{tpu_custom_call.1} parent=1 // pred_check
      _
    $region71: #{tpu_custom_call.1} parent=1 // pred_check_branch
      %98 = sbr.rel (0) target = $region73
    $region72: #{tpu_custom_call.1} parent=1 // pred_region
      %99 = dma.done [#allocation6], 384
    $region73: #{tpu_custom_call.1} parent=1 // pred_fallthru
      _
    // Predicated region
    $region74: #{tpu_custom_call.1} parent=1 // pred_check
      _
    $region75: #{tpu_custom_call.1} parent=1 // pred_check_branch
      %101 = sbr.rel (0) target = $region77
    $region76: #{tpu_custom_call.1} parent=1 // pred_region
      %102 = dma.done [#allocation9], 2048
    $region77: #{tpu_custom_call.1} parent=1 // pred_fallthru
      _
    %v103 = vld [vmem:[#allocation3] sm:$0xff]
    %v104 = vld [vmem:[%s9] sm:$0x1]
    %v105 = vld [vmem:[%s10] sm:$0x1]
    %vm106 = vcmask 195584
    %v107 = vsel %vm106, %v103, 0.0
    %108 = vadd.xlane.f32.xlu0 %v107
    %v109 = vpop.xlane.xlu0 %108
    %v110 = vmul.f32 %v103, %v103
    %v111 = vsel %vm106, %v110, 0.0
    %112 = vadd.xlane.f32.xlu0 %v111
    %v113 = vpop.xlane.xlu0 %112
    %v114 = vmul.f32 %v109, 0.041666668
    %v115 = vmul.f32 %v113, 0.041666668
    %v116 = vmul.f32 %v114, %v114
    %v117 = vsub.f32 %v115, %v116
    %v118 = vmax.f32 %v117, 0.0
    %v119 = vsub.f32 %v103, %v114
    %v120 = vadd.f32 %v118, 1e-05
    %v121 = vrsqrt.pop %v120
    %v122 = vmul.f32 %v119, %v121
    %v124 = vlaneseq
    %v125 = vshrl.u32 %v124, 7
    %v126 = vsub.s32 0, %v125
    %v127 = vrot.slane %v104, %v126
    %v129 = vmul.f32 %v122, %v127
    %v131 = vlaneseq
    %v132 = vshrl.u32 %v131, 7
    %v133 = vsub.s32 0, %v132
    %v134 = vrot.slane %v105, %v133
    %v136 = vadd.f32 %v129, %v134
    %v137 = vld [vmem:[#allocation7] sm:$0xff]
    %v138 = vld [vmem:[#allocation7 + $0x8] sm:$0xff]
    %v139 = vld [vmem:[#allocation7 + $0x10] sm:$0xff]
    %v140 = vld [vmem:[%s3] sm:$0x1]
    %v142 = vlaneseq
    %v143 = vshrl.u32 %v142, 7
    %v144 = vsub.s32 0, %v143
    %v145 = vrot.slane %v140, %v144
    %v148 = vsel %vm106, %v136, 0
    %150 = vmatprep.subr.mxu0 0.0
    %151 = vmatpush1.msra.mxu0 %v137
    %152 = vmatprep.subr.mxu0 0.0
    %153 = vmatpush1.msra.mxu0 %v138
    %154 = vmatprep.subr.mxu0 0.0
    %155 = vmatpush1.msra.mxu0 %v139
    %156 = vmatprep.subr.mxu0 0.0
    %157 = vmatpush1.msra.mxu0 0.0
    %158 = vmatprep.subr.mxu0 0.0
    %159 = vmatpush1.msra.mxu0 0.0
    %160 = vmatprep.subr.mxu0 0.0
    %161 = vmatpush1.msra.mxu0 0.0
    %162 = vmatprep.subr.mxu0 0.0
    %163 = vmatpush1.msra.mxu0 0.0
    %164 = vmatprep.subr.mxu0 0.0
    %165 = vmatpush1.msra.mxu0 0.0
    %166 = vmatprep.subr.mxu0 0.0
    %167 = vmatpush1.msra.mxu0 0.0
    %168 = vmatprep.subr.mxu0 0.0
    %169 = vmatpush1.msra.mxu0 0.0
    %170 = vmatprep.subr.mxu0 0.0
    %171 = vmatpush1.msra.mxu0 0.0
    %172 = vmatprep.subr.mxu0 0.0
    %173 = vmatpush1.msra.mxu0 0.0
    %174 = vmatprep.subr.mxu0 0.0
    %175 = vmatpush1.msra.mxu0 0.0
    %176 = vmatprep.subr.mxu0 0.0
    %177 = vmatpush1.msra.mxu0 0.0
    %178 = vmatprep.subr.mxu0 0.0
    %179 = vmatpush1.msra.mxu0 0.0
    %180 = vmatprep.subr.mxu0 0.0
    %181 = vmatpush1.msra.mxu0 0.0
    %182 = vmatprep.subr.mxu0 0.0
    %183 = vmatpush1.msra.mxu0 0.0
    %184 = vmatprep.subr.mxu0 0.0
    %185 = vmatpush1.msra.mxu0 0.0
    %186 = vmatprep.subr.mxu0 0.0
    %187 = vmatpush1.msra.mxu0 0.0
    %188 = vmatprep.subr.mxu0 0.0
    %189 = vmatpush1.msra.mxu0 0.0
    %190 = vmatprep.subr.mxu0 0.0
    %191 = vmatpush1.msra.mxu0 0.0
    %192 = vmatprep.subr.mxu0 0.0
    %193 = vmatpush1.msra.mxu0 0.0
    %194 = vmatprep.subr.mxu0 0.0
    %195 = vmatpush1.msra.mxu0 0.0
    %196 = vmatprep.subr.mxu0 0.0
    %197 = vmatpush1.msra.mxu0 0.0
    %198 = vmatprep.subr.mxu0 0.0
    %199 = vmatpush1.msra.mxu0 0.0
    %200 = vmatprep.subr.mxu0 0.0
    %201 = vmatpush1.msra.mxu0 0.0
    %202 = vmatprep.subr.mxu0 0.0
    %203 = vmatpush1.msra.mxu0 0.0
    %204 = vmatprep.subr.mxu0 0.0
    %205 = vmatpush1.msra.mxu0 0.0
    %206 = vmatprep.subr.mxu0 0.0
    %207 = vmatpush1.msra.mxu0 0.0
    %208 = vmatprep.subr.mxu0 0.0
    %209 = vmatpush1.msra.mxu0 0.0
    %210 = vmatprep.subr.mxu0 0.0
    %211 = vmatpush1.msra.mxu0 0.0
    %212 = vmatprep.subr.mxu0 0.0
    %213 = vmatpush1.msra.mxu0 0.0
    %214 = vmatprep.mubr.f32.mxu0 0.0
    %215 = vmatmul.mubr.f32.gmra.mrb[0].mxu0 %v148
    %v216 = vpop.f32.mrb[0].mxu0
    %v217 = vadd.f32 %v145, %v216
    %v218 = vpop.f32.mrb[0].mxu0
    %219 = vdwg.mxu0
    %v220 = vld [vmem:[%s11] sm:$0x1]
    %v221 = vld [vmem:[%s12] sm:$0x1]
    %222 = vadd.xlane.f32.xlu0 %v217
    %v223 = vpop.xlane.xlu0 %222
    %v224 = vmul.f32 %v217, %v217
    %225 = vadd.xlane.f32.xlu0 %v224
    %v226 = vpop.xlane.xlu0 %225
    %v227 = vmul.f32 %v223, 0.020833334
    %v228 = vmul.f32 %v226, 0.020833334
    %v229 = vmul.f32 %v227, %v227
    %v230 = vsub.f32 %v228, %v229
    %v231 = vmax.f32 %v230, 0.0
    %v232 = vsub.f32 %v217, %v227
    %v233 = vadd.f32 %v231, 1e-05
    %v234 = vrsqrt.pop %v233
    %v235 = vmul.f32 %v232, %v234
    %v237 = vlaneseq
    %v238 = vshrl.u32 %v237, 7
    %v239 = vsub.s32 0, %v238
    %v240 = vrot.slane %v220, %v239
    %v242 = vmul.f32 %v235, %v240
    %v244 = vlaneseq
    %v245 = vshrl.u32 %v244, 7
    %v246 = vsub.s32 0, %v245
    %v247 = vrot.slane %v221, %v246
    %v249 = vadd.f32 %v242, %v247
    %v250 = vmax.f32 %v249, 0.0
    %v251 = vld [vmem:[#allocation8] sm:$0xff]
    %v252 = vld [vmem:[#allocation8 + $0x8] sm:$0xff]
    %v253 = vld [vmem:[#allocation8 + $0x10] sm:$0xff]
    %v254 = vld [vmem:[#allocation8 + $0x18] sm:$0xff]
    %v255 = vld [vmem:[#allocation8 + $0x20] sm:$0xff]
    %v256 = vld [vmem:[#allocation8 + $0x28] sm:$0xff]
    %v257 = vld [vmem:[#allocation8 + $0x30] sm:$0xff]
    %v258 = vld [vmem:[#allocation8 + $0x38] sm:$0xff]
    %v259 = vld [vmem:[#allocation8 + $0x40] sm:$0xff]
    %v260 = vld [vmem:[#allocation8 + $0x48] sm:$0xff]
    %v261 = vld [vmem:[#allocation8 + $0x50] sm:$0xff]
    %v262 = vld [vmem:[#allocation8 + $0x58] sm:$0xff]
    %v263 = vld [vmem:[#allocation8 + $0x60] sm:$0xff]
    %v264 = vld [vmem:[#allocation8 + $0x68] sm:$0xff]
    %v265 = vld [vmem:[#allocation8 + $0x70] sm:$0xff]
    %v266 = vld [vmem:[#allocation8 + $0x78] sm:$0xff]
    %v267 = vld [vmem:[#allocation5] sm:$0xff]
    %v268 = vld [vmem:[%s5] sm:$0x3f]
    %vm269 = vcmask 48128
    %v271 = vsel %vm269, %v267, 0
    %vm273 = vcmask 1045504
    %v275 = vsel %vm273, %v268, 0
    %277 = vmatprep.subr.mxu0 0.0
    %278 = vmatpush1.msra.mxu0 %v275
    %279 = vmatprep.subr.mxu0 0.0
    %280 = vmatpush1.msra.mxu0 0.0
    %281 = vmatprep.subr.mxu0 0.0
    %282 = vmatpush1.msra.mxu0 0.0
    %283 = vmatprep.subr.mxu0 0.0
    %284 = vmatpush1.msra.mxu0 0.0
    %285 = vmatprep.subr.mxu0 0.0
    %286 = vmatpush1.msra.mxu0 0.0
    %287 = vmatprep.subr.mxu0 0.0
    %288 = vmatpush1.msra.mxu0 0.0
    %289 = vmatprep.subr.mxu0 0.0
    %290 = vmatpush1.msra.mxu0 0.0
    %291 = vmatprep.subr.mxu0 0.0
    %292 = vmatpush1.msra.mxu0 0.0
    %293 = vmatprep.subr.mxu0 0.0
    %294 = vmatpush1.msra.mxu0 0.0
    %295 = vmatprep.subr.mxu0 0.0
    %296 = vmatpush1.msra.mxu0 0.0
    %297 = vmatprep.subr.mxu0 0.0
    %298 = vmatpush1.msra.mxu0 0.0
    %299 = vmatprep.subr.mxu0 0.0
    %300 = vmatpush1.msra.mxu0 0.0
    %301 = vmatprep.subr.mxu0 0.0
    %302 = vmatpush1.msra.mxu0 0.0
    %303 = vmatprep.subr.mxu0 0.0
    %304 = vmatpush1.msra.mxu0 0.0
    %305 = vmatprep.subr.mxu0 0.0
    %306 = vmatpush1.msra.mxu0 0.0
    %307 = vmatprep.subr.mxu0 0.0
    %308 = vmatpush1.msra.mxu0 0.0
    %309 = vmatprep.subr.mxu0 0.0
    %310 = vmatpush1.msra.mxu0 0.0
    %311 = vmatprep.subr.mxu0 0.0
    %312 = vmatpush1.msra.mxu0 0.0
    %313 = vmatprep.subr.mxu0 0.0
    %314 = vmatpush1.msra.mxu0 0.0
    %315 = vmatprep.subr.mxu0 0.0
    %316 = vmatpush1.msra.mxu0 0.0
    %317 = vmatprep.subr.mxu0 0.0
    %318 = vmatpush1.msra.mxu0 0.0
    %319 = vmatprep.subr.mxu0 0.0
    %320 = vmatpush1.msra.mxu0 0.0
    %321 = vmatprep.subr.mxu0 0.0
    %322 = vmatpush1.msra.mxu0 0.0
    %323 = vmatprep.subr.mxu0 0.0
    %324 = vmatpush1.msra.mxu0 0.0
    %325 = vmatprep.subr.mxu0 0.0
    %326 = vmatpush1.msra.mxu0 0.0
    %327 = vmatprep.subr.mxu0 0.0
    %328 = vmatpush1.msra.mxu0 0.0
    %329 = vmatprep.subr.mxu0 0.0
    %330 = vmatpush1.msra.mxu0 0.0
    %331 = vmatprep.subr.mxu0 0.0
    %332 = vmatpush1.msra.mxu0 0.0
    %333 = vmatprep.subr.mxu0 0.0
    %334 = vmatpush1.msra.mxu0 0.0
    %335 = vmatprep.subr.mxu0 0.0
    %336 = vmatpush1.msra.mxu0 0.0
    %337 = vmatprep.subr.mxu0 0.0
    %338 = vmatpush1.msra.mxu0 0.0
    %339 = vmatprep.subr.mxu0 0.0
    %340 = vmatpush1.msra.mxu0 0.0
    %341 = vmatprep.mubr.f32.mxu0 0.0
    %342 = vmatmul.mubr.f32.gmra.mrb[0].mxu0 %v271
    %v343 = vpop.f32.mrb[0].mxu0
    %v344 = vadd.f32 0.0, %v343
    %v345 = vpop.f32.mrb[0].mxu0
    %346 = vdwg.mxu0
    %347 = vmatprep.subr.mxu0 0.0
    %348 = vmatpush1.msra.mxu0 %v251
    %349 = vmatprep.subr.mxu0 0.0
    %350 = vmatpush1.msra.mxu0 %v252
    %351 = vmatprep.subr.mxu0 0.0
    %352 = vmatpush1.msra.mxu0 %v253
    %353 = vmatprep.subr.mxu0 0.0
    %354 = vmatpush1.msra.mxu0 %v254
    %355 = vmatprep.subr.mxu0 0.0
    %356 = vmatpush1.msra.mxu0 %v255
    %357 = vmatprep.subr.mxu0 0.0
    %358 = vmatpush1.msra.mxu0 %v256
    %359 = vmatprep.subr.mxu0 0.0
    %360 = vmatpush1.msra.mxu0 %v257
    %361 = vmatprep.subr.mxu0 0.0
    %362 = vmatpush1.msra.mxu0 %v258
    %363 = vmatprep.subr.mxu0 0.0
    %364 = vmatpush1.msra.mxu0 %v259
    %365 = vmatprep.subr.mxu0 0.0
    %366 = vmatpush1.msra.mxu0 %v260
    %367 = vmatprep.subr.mxu0 0.0
    %368 = vmatpush1.msra.mxu0 %v261
    %369 = vmatprep.subr.mxu0 0.0
    %370 = vmatpush1.msra.mxu0 %v262
    %371 = vmatprep.subr.mxu0 0.0
    %372 = vmatpush1.msra.mxu0 %v263
    %373 = vmatprep.subr.mxu0 0.0
    %374 = vmatpush1.msra.mxu0 %v264
    %375 = vmatprep.subr.mxu0 0.0
    %376 = vmatpush1.msra.mxu0 %v265
    %377 = vmatprep.subr.mxu0 0.0
    %378 = vmatpush1.msra.mxu0 %v266
    %379 = vmatprep.subr.mxu0 0.0
    %380 = vmatpush1.msra.mxu0 0.0
    %381 = vmatprep.subr.mxu0 0.0
    %382 = vmatpush1.msra.mxu0 0.0
    %383 = vmatprep.subr.mxu0 0.0
    %384 = vmatpush1.msra.mxu0 0.0
    %385 = vmatprep.subr.mxu0 0.0
    %386 = vmatpush1.msra.mxu0 0.0
    %387 = vmatprep.subr.mxu0 0.0
    %388 = vmatpush1.msra.mxu0 0.0
    %389 = vmatprep.subr.mxu0 0.0
    %390 = vmatpush1.msra.mxu0 0.0
    %391 = vmatprep.subr.mxu0 0.0
    %392 = vmatpush1.msra.mxu0 0.0
    %393 = vmatprep.subr.mxu0 0.0
    %394 = vmatpush1.msra.mxu0 0.0
    %395 = vmatprep.subr.mxu0 0.0
    %396 = vmatpush1.msra.mxu0 0.0
    %397 = vmatprep.subr.mxu0 0.0
    %398 = vmatpush1.msra.mxu0 0.0
    %399 = vmatprep.subr.mxu0 0.0
    %400 = vmatpush1.msra.mxu0 0.0
    %401 = vmatprep.subr.mxu0 0.0
    %402 = vmatpush1.msra.mxu0 0.0
    %403 = vmatprep.subr.mxu0 0.0
    %404 = vmatpush1.msra.mxu0 0.0
    %405 = vmatprep.subr.mxu0 0.0
    %406 = vmatpush1.msra.mxu0 0.0
    %407 = vmatprep.subr.mxu0 0.0
    %408 = vmatpush1.msra.mxu0 0.0
    %409 = vmatprep.subr.mxu0 0.0
    %410 = vmatpush1.msra.mxu0 0.0
    %411 = vmatprep.mubr.f32.mxu0 0.0
    %412 = vmatmul.mubr.f32.gmra.mrb[0].mxu0 %v250
    %v413 = vpop.f32.mrb[0].mxu0
    %v414 = vadd.f32 %v344, %v413
    %v415 = vpop.f32.mrb[0].mxu0
    %416 = vdwg.mxu0
    %v417 = vld [vmem:[%s6] sm:$0x1]
    %v419 = vlaneseq
    %v420 = vshrl.u32 %v419, 7
    %v421 = vsub.s32 0, %v420
    %v422 = vrot.slane %v417, %v421
    %v424 = vadd.f32 %v414, %v422
    %v425 = vld [vmem:[%s13] sm:$0x1]
    %v426 = vld [vmem:[%s14] sm:$0x1]
    %427 = vadd.xlane.f32.xlu0 %v424
    %v428 = vpop.xlane.xlu0 %427
    %v429 = vmul.f32 %v424, %v424
    %430 = vadd.xlane.f32.xlu0 %v429
    %v431 = vpop.xlane.xlu0 %430
    %v432 = vmul.f32 %v428, 0.025
    %v433 = vmul.f32 %v431, 0.025
    %v434 = vmul.f32 %v432, %v432
    %v435 = vsub.f32 %v433, %v434
    %v436 = vmax.f32 %v435, 0.0
    %v437 = vsub.f32 %v424, %v432
    %v438 = vadd.f32 %v436, 1e-05
    %v439 = vrsqrt.pop %v438
    %v440 = vmul.f32 %v437, %v439
    %v442 = vlaneseq
    %v443 = vshrl.u32 %v442, 7
    %v444 = vsub.s32 0, %v443
    %v445 = vrot.slane %v425, %v444
    %v447 = vmul.f32 %v440, %v445
    %v449 = vlaneseq
    %v450 = vshrl.u32 %v449, 7
    %v451 = vsub.s32 0, %v450
    %v452 = vrot.slane %v426, %v451
    %v454 = vadd.f32 %v447, %v452
    %v455 = vmax.f32 %v454, 0.0
    %v456 = vld [vmem:[%s7] sm:$0x1]
    %v458 = vlaneseq
    %v459 = vshrl.u32 %v458, 7
    %v460 = vsub.s32 0, %v459
    %v461 = vrot.slane %v456, %v460
    %v463 = vmul.f32 %v455, %v461
    %464 = vadd.xlane.f32.xlu0 %v463
    %v465 = vpop.xlane.xlu0 %464
    %v466 = vld [vmem:[#allocation2] sm:$0x1]
    %v468 = vlaneseq
    %v469 = vshrl.u32 %v468, 7
    %v470 = vsub.s32 0, %v469
    %v471 = vrot.slane %v466, %v470
    %v473 = vadd.f32 %v465, %v471
    %vm474 = vcmask 7168
    %475 = vst.msk [vmem:[%s15] sm:$0xff] %vm474, %v473
    // Predicated region
    $region78: #{tpu_custom_call.1} parent=1 // pred_check
      _
    $region79: #{tpu_custom_call.1} parent=1 // pred_check_branch
      %477 = sbr.rel (0) target = $region81
    $region80: #{tpu_custom_call.1} parent=1 // pred_region
      _
    $region81: #{tpu_custom_call.1} parent=1 // pred_fallthru
      _
    // Predicated region
    $region82: #{tpu_custom_call.1} parent=1 // pred_check
      _
    $region83: #{tpu_custom_call.1} parent=1 // pred_check_branch
      %479 = sbr.rel (0) target = $region85
    $region84: #{tpu_custom_call.1} parent=1 // pred_region
      _
    $region85: #{tpu_custom_call.1} parent=1 // pred_fallthru
      _
    %480 = vsyncpa [#allocation4], 1
    %481 = vsyncpa [#allocation6], 1
    %482 = vsyncpa [#allocation9], 1

</llo_original>
